<compile_context>
chip_gen: v5e
topology: v5e:2x2
jax: 0.10.0
libtpu: 0.0.40
codegen_flags: <defaults>
</compile_context>

<pallas_src>
import functools
import math

import jax
import jax.numpy as jnp
from jax.experimental import pallas as pl
from jax.experimental.pallas import tpu as pltpu


_LOG_2PI = math.log(2.0 * math.pi)


def _round_up(x, m):
    return ((x + m - 1) // m) * m


# ---------------------------------------------------------------------------
# Kernels
# ---------------------------------------------------------------------------

def _entropy_kernel_packed(seg_ref, var_ref, h_ref, *, const):
    """Fast path (k divides 128).

    var_ref: (TR, 128) tile; each sublane row holds g = 128 // k batch elements.
    seg_ref: (128, g) constant 0/1 block-diagonal segment-sum matrix.
    h_ref  : (TR, g) output tile (natural sublane layout, no relayout).
    """
    logv = jnp.log(var_ref[...].astype(jnp.float32))           # full-lane EUP log
    seg_sum = jnp.dot(logv, seg_ref[...],
                      preferred_element_type=jnp.float32,
                      precision=jax.lax.Precision.HIGHEST)     # MXU, exact 0/1 sum
    h_ref[...] = (0.5 * seg_sum + const).astype(h_ref.dtype)
    # TODO(synk): torch's host-side `warnings.warn('NaN encountered')` has no
    # in-kernel/jit equivalent; the returned value is unaffected (matches torch).


def _entropy_kernel_rowsum(var_ref, h_ref, *, const):
    """Generic path (arbitrary k). var_ref: (TB, k); h_ref: (TB, 1)."""
    logv = jnp.log(var_ref[...].astype(jnp.float32))
    h_ref[...] = (0.5 * jnp.sum(logv, axis=-1, keepdims=True) + const
                  ).astype(h_ref.dtype)


# ---------------------------------------------------------------------------
# Tiling helpers
# ---------------------------------------------------------------------------

def _pick_rows(rows_needed, target_rows):
    """Pick a row tile (multiple of 8) and a padded row count (multiple of tile).

    Ensures >= 2 grid steps whenever there is enough work, so the 'parallel'
    axis actually shards across both TensorCores on v7x.
    """
    rows_needed = max(int(rows_needed), 1)
    if rows_needed <= 16:
        tr = _round_up(rows_needed, 8)
        return tr, tr
    n_steps = max(2, pl.cdiv(rows_needed, target_rows))
    tr = _round_up(pl.cdiv(rows_needed, n_steps), 8)
    return tr, tr * pl.cdiv(rows_needed, tr)


def _vmem_limit(buffer_bytes):
    """Scoped VMEM request from actual need, clamped to 32-48 MiB (< v7x 64 MiB)."""
    need = sum(buffer_bytes) + (4 << 20)        # slack for compiler temporaries
    return int(min(max(need, 32 << 20), 48 << 20))


# ---------------------------------------------------------------------------
# pallas_call wrappers
# ---------------------------------------------------------------------------

def _entropy_packed_call(var, B, k, itemsize, const):
    g = 128 // k
    rows_needed = pl.cdiv(B * k, 128)
    # ~1 MiB of real input data per block (bigger if var is sub-32-bit).
    target_rows = max(8, (1 << 20) // (128 * itemsize))
    TR, R = _pick_rows(rows_needed, target_rows)

    flat = var.reshape(-1)
    pad = R * 128 - B * k
    if pad:
        # Pad with 1.0 so log(pad) == 0 (padded outputs are sliced off anyway).
        flat = jnp.pad(flat, (0, pad), constant_values=1.0)
    var2 = flat.reshape(R, 128)

    # Constant (128, g) 0/1 block-diagonal matrix: column j sums lanes [j*k, (j+1)*k).
    seg = (jnp.arange(128)[:, None] // k == jnp.arange(g)[None, :]
           ).astype(jnp.float32)

    kernel = functools.partial(_entropy_kernel_packed, const=float(const))
    vmem = _vmem_limit([
        2 * TR * 128 * itemsize,            # double-buffered input tiles
        2 * TR * 128 * 4,                   # lane-padded output buffers
        2 * 128 * 128 * 4,                  # resident segment matrix
    ])

    h2 = pl.pallas_call(
        kernel,
        out_shape=jax.ShapeDtypeStruct((R, g), jnp.float32),
        grid_spec=pltpu.PrefetchScalarGridSpec(
            num_scalar_prefetch=0,
            grid=(R // TR,),
            in_specs=[
                pl.BlockSpec((128, g), lambda i: (0, 0)),   # constant, stays resident
                pl.BlockSpec((TR, 128), lambda i: (i, 0)),
            ],
            out_specs=pl.BlockSpec((TR, g), lambda i: (i, 0)),
        ),
        compiler_params=pltpu.CompilerParams(
            dimension_semantics=("parallel",),
            vmem_limit_bytes=vmem,
        ),
    )(seg, var2)
    return h2.reshape(-1)


def _entropy_rowsum_call(var, B, k, itemsize, const):
    # Generic path for k that does not divide 128; size blocks by their
    # lane-padded VMEM footprint (~2 MiB) to stay VMEM-safe.
    padded_row_bytes = _round_up(k, 128) * itemsize
    target_rows = max(8, (2 << 20) // padded_row_bytes)
    TB, Bp = _pick_rows(B, target_rows)

    var2 = var.reshape(B, k)
    if Bp != B:
        var2 = jnp.pad(var2, ((0, Bp - B), (0, 0)), constant_values=1.0)

    kernel = functools.partial(_entropy_kernel_rowsum, const=float(const))
    vmem = _vmem_limit([
        2 * TB * _round_up(k, 128) * itemsize,   # double-buffered (lane-padded) input
        2 * TB * 128 * 4,                        # lane-padded output buffers
    ])

    h2 = pl.pallas_call(
        kernel,
        out_shape=jax.ShapeDtypeStruct((Bp, 1), jnp.float32),
        grid_spec=pltpu.PrefetchScalarGridSpec(
            num_scalar_prefetch=0,
            grid=(Bp // TB,),
            in_specs=[pl.BlockSpec((TB, k), lambda i: (i, 0))],
            out_specs=pl.BlockSpec((TB, 1), lambda i: (i, 0)),
        ),
        compiler_params=pltpu.CompilerParams(
            dimension_semantics=("parallel",),
            vmem_limit_bytes=vmem,
        ),
    )(var2)
    return h2.reshape(-1)


def entropy_diagonal_gaussian(mu, var):
    """Pallas TPU implementation of EntropyDiagonalGaussian.forward.

    mu:  [..., k]  (unused by forward, kept for API parity)
    var: [..., k]  diagonal variances (any float dtype; upcast to f32 in-kernel)
    returns h: [...] float32
    """
    del mu  # forward() never reads mu
    *batch, k = var.shape
    B = 1
    for d in batch:
        B *= d
    itemsize = jnp.dtype(var.dtype).itemsize
    const = 0.5 * k * (1.0 + _LOG_2PI)   # folded at trace time

    if 0 < k <= 128 and 128 % k == 0:
        h_flat = _entropy_packed_call(var, B, k, itemsize, const)
    else:
        h_flat = _entropy_rowsum_call(var, B, k, itemsize, const)
    return h_flat[:B].reshape(tuple(batch))


def _reference(mu, var):
    # Pure-JAX reference mirroring the PyTorch module exactly.
    del mu
    k = var.shape[-1]
    h = 0.5 * (jnp.sum(jnp.log(var.astype(jnp.float32)), axis=-1)
               + k * (1.0 + jnp.log(2.0 * jnp.pi)))
    return h.astype(jnp.float32)


if __name__ == "__main__":
    key = jax.random.PRNGKey(0)
    k_mu, k1, k2, k3 = jax.random.split(key, 4)

    # 1) Small case implied by the module: batch=(2,4), k=16 -> packed path.
    mu = jax.random.normal(k_mu, (2, 4, 16), dtype=jnp.float32)
    var = jnp.abs(jax.random.normal(k1, (2, 4, 16), dtype=jnp.float32)) + 0.1
    h = jax.block_until_ready(entropy_diagonal_gaussian(mu, var))
    assert h.shape == (2, 4)
    assert jnp.allclose(h, _reference(mu, var), rtol=1e-5, atol=1e-5)

    # 2) Packed path with a multi-step "parallel" grid (B=256, k=16 -> grid=(2,)).
    mu2 = jnp.zeros((256, 16), dtype=jnp.float32)
    var2 = jnp.abs(jax.random.normal(k2, (256, 16), dtype=jnp.float32)) + 0.1
    h2 = jax.block_until_ready(entropy_diagonal_gaussian(mu2, var2))
    assert h2.shape == (256,)
    assert jnp.allclose(h2, _reference(mu2, var2), rtol=1e-5, atol=1e-5)

    # 3) Generic row-sum path: k=20 does not divide 128, B=10 not a multiple of 8.
    mu3 = jnp.zeros((10, 20), dtype=jnp.float32)
    var3 = jnp.abs(jax.random.normal(k3, (10, 20), dtype=jnp.float32)) + 0.1
    h3 = jax.block_until_ready(entropy_diagonal_gaussian(mu3, var3))
    assert h3.shape == (10,)
    assert jnp.allclose(h3, _reference(mu3, var3), rtol=1e-5, atol=1e-5)

    print("KERNEL_OK")
</pallas_src>

<mosaic_0001>
module attributes {stable_mosaic.version = 11 : i64} {
  func.func @_entropy_kernel_packed(%arg0: i32, %arg1: memref<128x8xf32, #tpu.memory_space<vmem>>, %arg2: memref<8x128xf32, #tpu.memory_space<vmem>>, %arg3: memref<8x8xf32, #tpu.memory_space<vmem>>) attributes {dimension_semantics = [#tpu.dimension_semantics<parallel>], iteration_bounds = array<i64: 1>, scalar_prefetch = 0 : i64, scratch_operands = 0 : i64, tpu.core_type = #tpu.core_type<tc>, window_params = [{pipeline_mode = #tpu.pipeline_mode<synchronous>, transform_indices = @transform_0, window_bounds = array<i64: 128, 8>}, {transform_indices = @transform_1, window_bounds = array<i64: 8, 128>}, {transform_indices = @transform_2, window_bounds = array<i64: 8, 8>}]} {
    %c0 = arith.constant 0 : index
    %c0_0 = arith.constant 0 : index
    %0 = vector.load %arg2[%c0, %c0_0] : memref<8x128xf32, #tpu.memory_space<vmem>>, vector<8x128xf32>
    %1 = math.log %0 : vector<8x128xf32>
    %c0_1 = arith.constant 0 : index
    %c0_2 = arith.constant 0 : index
    %2 = vector.load %arg1[%c0_1, %c0_2] : memref<128x8xf32, #tpu.memory_space<vmem>>, vector<128x8xf32>
    %cst = arith.constant dense<0.000000e+00> : vector<8x8xf32>
    %3 = tpu.matmul %1, %2, %cst {dimension_numbers = #tpu.dot_dimension_numbers<[1], [0], [0], [1], [0, 0, 1, 1], [], []>, precision = #tpu.contract_precision<fp32>} : vector<8x128xf32>, vector<128x8xf32>, vector<8x8xf32> -> vector<8x8xf32>
    %cst_3 = arith.constant 5.000000e-01 : f32
    %4 = vector.broadcast %cst_3 : f32 to vector<8x8xf32>
    %5 = arith.mulf %4, %3 : vector<8x8xf32>
    %cst_4 = arith.constant 22.7030163 : f32
    %6 = vector.broadcast %cst_4 : f32 to vector<8x8xf32>
    %7 = arith.addf %5, %6 : vector<8x8xf32>
    %c0_5 = arith.constant 0 : index
    %c0_6 = arith.constant 0 : index
    %8 = vector.load %arg3[%c0_5, %c0_6] : memref<8x8xf32, #tpu.memory_space<vmem>>, vector<8x8xf32>
    tpu.vector_store %arg3[%c0_5, %c0_6], %7 {strides = array<i32>} : memref<8x8xf32, #tpu.memory_space<vmem>>, vector<8x8xf32>,
    return
  }
  func.func @transform_0(%arg0: i32) -> (i32, i32) {
    %c0_i32 = arith.constant 0 : i32
    %c0_i32_0 = arith.constant 0 : i32
    %c0_i32_1 = arith.constant 0 : i32
    return %c0_i32, %c0_i32_0 : i32, i32
  }
  func.func @transform_1(%arg0: i32) -> (i32, i32) {
    %c0_i32 = arith.constant 0 : i32
    %c0_i32_0 = arith.constant 0 : i32
    return %arg0, %c0_i32 : i32, i32
  }
  func.func @transform_2(%arg0: i32) -> (i32, i32) {
    %c0_i32 = arith.constant 0 : i32
    %c0_i32_0 = arith.constant 0 : i32
    return %arg0, %c0_i32 : i32, i32
  }
}

</mosaic_0001>

<llo_original>
// kernel: tpu_custom_call.1
$region0: #{tpu_custom_call.1}
  #allocation0 [shape = 'u32[]', space=smem, size = 0x4, offset = 0x4, fixed_abs, tag = 'smem constant byte address 0x4 - core index']
  #allocation1 [shape = 'u32[72,128]{1,0:T(1,128)}', space=vmem, size = 0x9000, scoped, tag = 'internal scratch']
  %s0 = inlined_call_operand.vmem [shape: f32[128,8], index: 0, kind: input, shape index: {}]
  %s1 = inlined_call_operand.vmem [shape: f32[8,128], index: 1, kind: input, shape index: {}]
  %s2 = inlined_call_operand.hbm [shape: f32[8,8], index: 2, kind: output, shape index: {}]
  %s3 = sld [smem:[#allocation0]]
  $region18: #{tpu_custom_call.1} parent=0
    _
  %s5 = ssub.s32 1, %s3
  %s6 = scalar_select 0, %s5, %s3
  $region1: #{tpu_custom_call.1} parent=0
    #allocation2 [shape = 'u8[4096]{0}', space=vmem, size = 0x1000, scoped, tag = 'output window, operand 0, single buffered']
    #allocation3 [shape = 's32[1]{0}', space=sflag, size = 0x4, scoped, tag = 'scoped memory for tpu_custom_call.1']
    %7 = vsyncpa [#allocation3], 0
    // Predicated region
    $region2: #{tpu_custom_call.1} parent=1 // pred_check
      _
    $region3: #{tpu_custom_call.1} parent=1 // pred_check_branch
      %9 = sbr.rel (0) target = $region5
    $region4: #{tpu_custom_call.1} parent=1 // pred_region
      _
    $region5: #{tpu_custom_call.1} parent=1 // pred_fallthru
      _
    // Predicated region
    $region6: #{tpu_custom_call.1} parent=1 // pred_check
      _
    $region7: #{tpu_custom_call.1} parent=1 // pred_check_branch
      %11 = sbr.rel (0) target = $region9
    $region8: #{tpu_custom_call.1} parent=1 // pred_region
      _
    $region9: #{tpu_custom_call.1} parent=1 // pred_fallthru
      _
    %v12 = vld [vmem:[%s1] sm:$0xff]
    %v13 = vlog2.pop %v12
    %v14 = vmul.f32 %v13, 0.6931472
    %v15 = vld [vmem:[%s0] sm:$0xff]
    %v16 = vld [vmem:[%s0 + $0x8] sm:$0xff]
    %v17 = vld [vmem:[%s0 + $0x10] sm:$0xff]
    %v18 = vld [vmem:[%s0 + $0x18] sm:$0xff]
    %v19 = vld [vmem:[%s0 + $0x20] sm:$0xff]
    %v20 = vld [vmem:[%s0 + $0x28] sm:$0xff]
    %v21 = vld [vmem:[%s0 + $0x30] sm:$0xff]
    %v22 = vld [vmem:[%s0 + $0x38] sm:$0xff]
    %v23 = vld [vmem:[%s0 + $0x40] sm:$0xff]
    %v24 = vld [vmem:[%s0 + $0x48] sm:$0xff]
    %v25 = vld [vmem:[%s0 + $0x50] sm:$0xff]
    %v26 = vld [vmem:[%s0 + $0x58] sm:$0xff]
    %v27 = vld [vmem:[%s0 + $0x60] sm:$0xff]
    %v28 = vld [vmem:[%s0 + $0x68] sm:$0xff]
    %v29 = vld [vmem:[%s0 + $0x70] sm:$0xff]
    %v30 = vld [vmem:[%s0 + $0x78] sm:$0xff]
    %v31 = vand.u32 %v30, 4294901760
    %32 = vmatpush.msra.mxu0 %v31
    %v33 = vand.u32 %v29, 4294901760
    %34 = vmatpush.msra.mxu0 %v33
    %v35 = vand.u32 %v28, 4294901760
    %36 = vmatpush.msra.mxu0 %v35
    %v37 = vand.u32 %v27, 4294901760
    %38 = vmatpush.msra.mxu0 %v37
    %v39 = vand.u32 %v26, 4294901760
    %40 = vmatpush.msra.mxu0 %v39
    %v41 = vand.u32 %v25, 4294901760
    %42 = vmatpush.msra.mxu0 %v41
    %v43 = vand.u32 %v24, 4294901760
    %44 = vmatpush.msra.mxu0 %v43
    %v45 = vand.u32 %v23, 4294901760
    %46 = vmatpush.msra.mxu0 %v45
    %v47 = vand.u32 %v22, 4294901760
    %48 = vmatpush.msra.mxu0 %v47
    %v49 = vand.u32 %v21, 4294901760
    %50 = vmatpush.msra.mxu0 %v49
    %v51 = vand.u32 %v20, 4294901760
    %52 = vmatpush.msra.mxu0 %v51
    %v53 = vand.u32 %v19, 4294901760
    %54 = vmatpush.msra.mxu0 %v53
    %v55 = vand.u32 %v18, 4294901760
    %56 = vmatpush.msra.mxu0 %v55
    %v57 = vand.u32 %v17, 4294901760
    %58 = vmatpush.msra.mxu0 %v57
    %v59 = vand.u32 %v16, 4294901760
    %60 = vmatpush.msra.mxu0 %v59
    %v61 = vand.u32 %v15, 4294901760
    %62 = vmatpush.msra.mxu0 %v61
    %v63 = vand.u32 %v14, 4294901760
    %v64 = vsub.f32 %v14, %v63
    %v65 = vand.u32 %v64, 4294901760
    %v66 = vsub.f32 %v64, %v65
    %v67 = vand.u32 %v66, 4294901760
    %68 = vmatmul.f32.gmra.mxu0 %v67
    %v69 = vpop.f32.mrf.mxu0
    %v70 = vadd.f32 0.0, %v69
    %71 = vdwg.mxu0
    %v72 = vand.u32 %v30, 4294901760
    %v73 = vsub.f32 %v30, %v72
    %v74 = vand.u32 %v73, 4294901760
    %v75 = vsub.f32 %v73, %v74
    %v76 = vand.u32 %v75, 4294901760
    %77 = vmatpush.msra.mxu0 %v76
    %v78 = vand.u32 %v29, 4294901760
    %v79 = vsub.f32 %v29, %v78
    %v80 = vand.u32 %v79, 4294901760
    %v81 = vsub.f32 %v79, %v80
    %v82 = vand.u32 %v81, 4294901760
    %83 = vmatpush.msra.mxu0 %v82
    %v84 = vand.u32 %v28, 4294901760
    %v85 = vsub.f32 %v28, %v84
    %v86 = vand.u32 %v85, 4294901760
    %v87 = vsub.f32 %v85, %v86
    %v88 = vand.u32 %v87, 4294901760
    %89 = vmatpush.msra.mxu0 %v88
    %v90 = vand.u32 %v27, 4294901760
    %v91 = vsub.f32 %v27, %v90
    %v92 = vand.u32 %v91, 4294901760
    %v93 = vsub.f32 %v91, %v92
    %v94 = vand.u32 %v93, 4294901760
    %95 = vmatpush.msra.mxu0 %v94
    %v96 = vand.u32 %v26, 4294901760
    %v97 = vsub.f32 %v26, %v96
    %v98 = vand.u32 %v97, 4294901760
    %v99 = vsub.f32 %v97, %v98
    %v100 = vand.u32 %v99, 4294901760
    %101 = vmatpush.msra.mxu0 %v100
    %v102 = vand.u32 %v25, 4294901760
    %v103 = vsub.f32 %v25, %v102
    %v104 = vand.u32 %v103, 4294901760
    %v105 = vsub.f32 %v103, %v104
    %v106 = vand.u32 %v105, 4294901760
    %107 = vmatpush.msra.mxu0 %v106
    %v108 = vand.u32 %v24, 4294901760
    %v109 = vsub.f32 %v24, %v108
    %v110 = vand.u32 %v109, 4294901760
    %v111 = vsub.f32 %v109, %v110
    %v112 = vand.u32 %v111, 4294901760
    %113 = vmatpush.msra.mxu0 %v112
    %v114 = vand.u32 %v23, 4294901760
    %v115 = vsub.f32 %v23, %v114
    %v116 = vand.u32 %v115, 4294901760
    %v117 = vsub.f32 %v115, %v116
    %v118 = vand.u32 %v117, 4294901760
    %119 = vmatpush.msra.mxu0 %v118
    %v120 = vand.u32 %v22, 4294901760
    %v121 = vsub.f32 %v22, %v120
    %v122 = vand.u32 %v121, 4294901760
    %v123 = vsub.f32 %v121, %v122
    %v124 = vand.u32 %v123, 4294901760
    %125 = vmatpush.msra.mxu0 %v124
    %v126 = vand.u32 %v21, 4294901760
    %v127 = vsub.f32 %v21, %v126
    %v128 = vand.u32 %v127, 4294901760
    %v129 = vsub.f32 %v127, %v128
    %v130 = vand.u32 %v129, 4294901760
    %131 = vmatpush.msra.mxu0 %v130
    %v132 = vand.u32 %v20, 4294901760
    %v133 = vsub.f32 %v20, %v132
    %v134 = vand.u32 %v133, 4294901760
    %v135 = vsub.f32 %v133, %v134
    %v136 = vand.u32 %v135, 4294901760
    %137 = vmatpush.msra.mxu0 %v136
    %v138 = vand.u32 %v19, 4294901760
    %v139 = vsub.f32 %v19, %v138
    %v140 = vand.u32 %v139, 4294901760
    %v141 = vsub.f32 %v139, %v140
    %v142 = vand.u32 %v141, 4294901760
    %143 = vmatpush.msra.mxu0 %v142
    %v144 = vand.u32 %v18, 4294901760
    %v145 = vsub.f32 %v18, %v144
    %v146 = vand.u32 %v145, 4294901760
    %v147 = vsub.f32 %v145, %v146
    %v148 = vand.u32 %v147, 4294901760
    %149 = vmatpush.msra.mxu0 %v148
    %v150 = vand.u32 %v17, 4294901760
    %v151 = vsub.f32 %v17, %v150
    %v152 = vand.u32 %v151, 4294901760
    %v153 = vsub.f32 %v151, %v152
    %v154 = vand.u32 %v153, 4294901760
    %155 = vmatpush.msra.mxu0 %v154
    %v156 = vand.u32 %v16, 4294901760
    %v157 = vsub.f32 %v16, %v156
    %v158 = vand.u32 %v157, 4294901760
    %v159 = vsub.f32 %v157, %v158
    %v160 = vand.u32 %v159, 4294901760
    %161 = vmatpush.msra.mxu0 %v160
    %v162 = vand.u32 %v15, 4294901760
    %v163 = vsub.f32 %v15, %v162
    %v164 = vand.u32 %v163, 4294901760
    %v165 = vsub.f32 %v163, %v164
    %v166 = vand.u32 %v165, 4294901760
    %167 = vmatpush.msra.mxu0 %v166
    %v168 = vand.u32 %v14, 4294901760
    %169 = vmatmul.f32.gmra.mxu0 %v168
    %v170 = vpop.f32.mrf.mxu0
    %v171 = vadd.f32 %v70, %v170
    %172 = vdwg.mxu0
    %v173 = vand.u32 %v30, 4294901760
    %v174 = vsub.f32 %v30, %v173
    %175 = vmatpush.msra.mxu0 %v174
    %v176 = vand.u32 %v29, 4294901760
    %v177 = vsub.f32 %v29, %v176
    %178 = vmatpush.msra.mxu0 %v177
    %v179 = vand.u32 %v28, 4294901760
    %v180 = vsub.f32 %v28, %v179
    %181 = vmatpush.msra.mxu0 %v180
    %v182 = vand.u32 %v27, 4294901760
    %v183 = vsub.f32 %v27, %v182
    %184 = vmatpush.msra.mxu0 %v183
    %v185 = vand.u32 %v26, 4294901760
    %v186 = vsub.f32 %v26, %v185
    %187 = vmatpush.msra.mxu0 %v186
    %v188 = vand.u32 %v25, 4294901760
    %v189 = vsub.f32 %v25, %v188
    %190 = vmatpush.msra.mxu0 %v189
    %v191 = vand.u32 %v24, 4294901760
    %v192 = vsub.f32 %v24, %v191
    %193 = vmatpush.msra.mxu0 %v192
    %v194 = vand.u32 %v23, 4294901760
    %v195 = vsub.f32 %v23, %v194
    %196 = vmatpush.msra.mxu0 %v195
    %v197 = vand.u32 %v22, 4294901760
    %v198 = vsub.f32 %v22, %v197
    %199 = vmatpush.msra.mxu0 %v198
    %v200 = vand.u32 %v21, 4294901760
    %v201 = vsub.f32 %v21, %v200
    %202 = vmatpush.msra.mxu0 %v201
    %v203 = vand.u32 %v20, 4294901760
    %v204 = vsub.f32 %v20, %v203
    %205 = vmatpush.msra.mxu0 %v204
    %v206 = vand.u32 %v19, 4294901760
    %v207 = vsub.f32 %v19, %v206
    %208 = vmatpush.msra.mxu0 %v207
    %v209 = vand.u32 %v18, 4294901760
    %v210 = vsub.f32 %v18, %v209
    %211 = vmatpush.msra.mxu0 %v210
    %v212 = vand.u32 %v17, 4294901760
    %v213 = vsub.f32 %v17, %v212
    %214 = vmatpush.msra.mxu0 %v213
    %v215 = vand.u32 %v16, 4294901760
    %v216 = vsub.f32 %v16, %v215
    %217 = vmatpush.msra.mxu0 %v216
    %v218 = vand.u32 %v15, 4294901760
    %v219 = vsub.f32 %v15, %v218
    %220 = vmatpush.msra.mxu0 %v219
    %v221 = vand.u32 %v14, 4294901760
    %v222 = vsub.f32 %v14, %v221
    %223 = vmatmul.f32.gmra.mxu0 %v222
    %v224 = vpop.f32.mrf.mxu0
    %v225 = vadd.f32 %v171, %v224
    %226 = vdwg.mxu0
    %v227 = vand.u32 %v30, 4294901760
    %228 = vmatpush.msra.mxu0 %v227
    %v229 = vand.u32 %v29, 4294901760
    %230 = vmatpush.msra.mxu0 %v229
    %v231 = vand.u32 %v28, 4294901760
    %232 = vmatpush.msra.mxu0 %v231
    %v233 = vand.u32 %v27, 4294901760
    %234 = vmatpush.msra.mxu0 %v233
    %v235 = vand.u32 %v26, 4294901760
    %236 = vmatpush.msra.mxu0 %v235
    %v237 = vand.u32 %v25, 4294901760
    %238 = vmatpush.msra.mxu0 %v237
    %v239 = vand.u32 %v24, 4294901760
    %240 = vmatpush.msra.mxu0 %v239
    %v241 = vand.u32 %v23, 4294901760
    %242 = vmatpush.msra.mxu0 %v241
    %v243 = vand.u32 %v22, 4294901760
    %244 = vmatpush.msra.mxu0 %v243
    %v245 = vand.u32 %v21, 4294901760
    %246 = vmatpush.msra.mxu0 %v245
    %v247 = vand.u32 %v20, 4294901760
    %248 = vmatpush.msra.mxu0 %v247
    %v249 = vand.u32 %v19, 4294901760
    %250 = vmatpush.msra.mxu0 %v249
    %v251 = vand.u32 %v18, 4294901760
    %252 = vmatpush.msra.mxu0 %v251
    %v253 = vand.u32 %v17, 4294901760
    %254 = vmatpush.msra.mxu0 %v253
    %v255 = vand.u32 %v16, 4294901760
    %256 = vmatpush.msra.mxu0 %v255
    %v257 = vand.u32 %v15, 4294901760
    %258 = vmatpush.msra.mxu0 %v257
    %v259 = vand.u32 %v14, 4294901760
    %v260 = vsub.f32 %v14, %v259
    %v261 = vand.u32 %v260, 4294901760
    %262 = vmatmul.f32.gmra.mxu0 %v261
    %v263 = vpop.f32.mrf.mxu0
    %v264 = vadd.f32 %v225, %v263
    %265 = vdwg.mxu0
    %v266 = vand.u32 %v30, 4294901760
    %v267 = vsub.f32 %v30, %v266
    %v268 = vand.u32 %v267, 4294901760
    %269 = vmatpush.msra.mxu0 %v268
    %v270 = vand.u32 %v29, 4294901760
    %v271 = vsub.f32 %v29, %v270
    %v272 = vand.u32 %v271, 4294901760
    %273 = vmatpush.msra.mxu0 %v272
    %v274 = vand.u32 %v28, 4294901760
    %v275 = vsub.f32 %v28, %v274
    %v276 = vand.u32 %v275, 4294901760
    %277 = vmatpush.msra.mxu0 %v276
    %v278 = vand.u32 %v27, 4294901760
    %v279 = vsub.f32 %v27, %v278
    %v280 = vand.u32 %v279, 4294901760
    %281 = vmatpush.msra.mxu0 %v280
    %v282 = vand.u32 %v26, 4294901760
    %v283 = vsub.f32 %v26, %v282
    %v284 = vand.u32 %v283, 4294901760
    %285 = vmatpush.msra.mxu0 %v284
    %v286 = vand.u32 %v25, 4294901760
    %v287 = vsub.f32 %v25, %v286
    %v288 = vand.u32 %v287, 4294901760
    %289 = vmatpush.msra.mxu0 %v288
    %v290 = vand.u32 %v24, 4294901760
    %v291 = vsub.f32 %v24, %v290
    %v292 = vand.u32 %v291, 4294901760
    %293 = vmatpush.msra.mxu0 %v292
    %v294 = vand.u32 %v23, 4294901760
    %v295 = vsub.f32 %v23, %v294
    %v296 = vand.u32 %v295, 4294901760
    %297 = vmatpush.msra.mxu0 %v296
    %v298 = vand.u32 %v22, 4294901760
    %v299 = vsub.f32 %v22, %v298
    %v300 = vand.u32 %v299, 4294901760
    %301 = vmatpush.msra.mxu0 %v300
    %v302 = vand.u32 %v21, 4294901760
    %v303 = vsub.f32 %v21, %v302
    %v304 = vand.u32 %v303, 4294901760
    %305 = vmatpush.msra.mxu0 %v304
    %v306 = vand.u32 %v20, 4294901760
    %v307 = vsub.f32 %v20, %v306
    %v308 = vand.u32 %v307, 4294901760
    %309 = vmatpush.msra.mxu0 %v308
    %v310 = vand.u32 %v19, 4294901760
    %v311 = vsub.f32 %v19, %v310
    %v312 = vand.u32 %v311, 4294901760
    %313 = vmatpush.msra.mxu0 %v312
    %v314 = vand.u32 %v18, 4294901760
    %v315 = vsub.f32 %v18, %v314
    %v316 = vand.u32 %v315, 4294901760
    %317 = vmatpush.msra.mxu0 %v316
    %v318 = vand.u32 %v17, 4294901760
    %v319 = vsub.f32 %v17, %v318
    %v320 = vand.u32 %v319, 4294901760
    %321 = vmatpush.msra.mxu0 %v320
    %v322 = vand.u32 %v16, 4294901760
    %v323 = vsub.f32 %v16, %v322
    %v324 = vand.u32 %v323, 4294901760
    %325 = vmatpush.msra.mxu0 %v324
    %v326 = vand.u32 %v15, 4294901760
    %v327 = vsub.f32 %v15, %v326
    %v328 = vand.u32 %v327, 4294901760
    %329 = vmatpush.msra.mxu0 %v328
    %v330 = vand.u32 %v14, 4294901760
    %331 = vmatmul.f32.gmra.mxu0 %v330
    %v332 = vpop.f32.mrf.mxu0
    %v333 = vadd.f32 %v264, %v332
    %334 = vdwg.mxu0
    %v335 = vand.u32 %v30, 4294901760
    %336 = vmatpush.msra.mxu0 %v335
    %v337 = vand.u32 %v29, 4294901760
    %338 = vmatpush.msra.mxu0 %v337
    %v339 = vand.u32 %v28, 4294901760
    %340 = vmatpush.msra.mxu0 %v339
    %v341 = vand.u32 %v27, 4294901760
    %342 = vmatpush.msra.mxu0 %v341
    %v343 = vand.u32 %v26, 4294901760
    %344 = vmatpush.msra.mxu0 %v343
    %v345 = vand.u32 %v25, 4294901760
    %346 = vmatpush.msra.mxu0 %v345
    %v347 = vand.u32 %v24, 4294901760
    %348 = vmatpush.msra.mxu0 %v347
    %v349 = vand.u32 %v23, 4294901760
    %350 = vmatpush.msra.mxu0 %v349
    %v351 = vand.u32 %v22, 4294901760
    %352 = vmatpush.msra.mxu0 %v351
    %v353 = vand.u32 %v21, 4294901760
    %354 = vmatpush.msra.mxu0 %v353
    %v355 = vand.u32 %v20, 4294901760
    %356 = vmatpush.msra.mxu0 %v355
    %v357 = vand.u32 %v19, 4294901760
    %358 = vmatpush.msra.mxu0 %v357
    %v359 = vand.u32 %v18, 4294901760
    %360 = vmatpush.msra.mxu0 %v359
    %v361 = vand.u32 %v17, 4294901760
    %362 = vmatpush.msra.mxu0 %v361
    %v363 = vand.u32 %v16, 4294901760
    %364 = vmatpush.msra.mxu0 %v363
    %v365 = vand.u32 %v15, 4294901760
    %366 = vmatpush.msra.mxu0 %v365
    %v367 = vand.u32 %v14, 4294901760
    %368 = vmatmul.f32.gmra.mxu0 %v367
    %v369 = vpop.f32.mrf.mxu0
    %v370 = vadd.f32 %v333, %v369
    %371 = vdwg.mxu0
    %v372 = vmul.f32 %v370, 0.5
    %v373 = vadd.f32 %v372, 22.703016
    %vm374 = vcmask 64512
    %375 = vst.msk [vmem:[#allocation2] sm:$0xff] %vm374, %v373
    // Predicated region
    $region10: #{tpu_custom_call.1} parent=1 // pred_check
      _
    $region11: #{tpu_custom_call.1} parent=1 // pred_check_branch
      %377 = sbr.rel (0) target = $region13
    $region12: #{tpu_custom_call.1} parent=1 // pred_region
      %379 = vsyncadd [#allocation3], 0
      %s381 = sshll.u32 [#allocation2], 4
      %s382 = int_to_ptr.vmem [resolvable:$true] %s381
      %s383 = sshll.u32 %s2, 4
      %s384 = int_to_ptr.hbm [resolvable:$true] %s383
      %386 = dma.vmem_to_hbm [thread:$0]  %s382, 128, %s384, [#allocation3]
    $region13: #{tpu_custom_call.1} parent=1 // pred_fallthru
      _
    // Predicated region
    $region14: #{tpu_custom_call.1} parent=1 // pred_check
      _
    $region15: #{tpu_custom_call.1} parent=1 // pred_check_branch
      %388 = sbr.rel (0) target = $region17
    $region16: #{tpu_custom_call.1} parent=1 // pred_region
      %390 = dma.done [#allocation3], 128
    $region17: #{tpu_custom_call.1} parent=1 // pred_fallthru
      _
    %391 = vsyncpa [#allocation3], 1

</llo_original>
